<compile_context>
chip_gen: v5e
topology: v5e:2x2
jax: 0.10.0
libtpu: 0.0.40
codegen_flags: <defaults>
</compile_context>

<pallas_src>
import jax
import jax.numpy as jnp
from jax.experimental import pallas as pl
from jax.experimental.pallas import tpu as pltpu

LANE = 128      # vreg lane width
SUBLANE = 8     # vreg sublane height


def perception_kernel(x_ref, w1_ref, b1_ref, w2_ref, b2_ref, o_ref):
    # Layer 1: x @ W1 + b1  (MXU matmul, f32 accumulation), then sigmoid (EUP).
    h = jnp.dot(x_ref[...], w1_ref[...], preferred_element_type=jnp.float32)
    h = jax.nn.sigmoid(h + b1_ref[...])            # (B, Hp), lane-dense
    # Layer 2: h @ W2 + b2
    y = jnp.dot(h, w2_ref[...], preferred_element_type=jnp.float32)
    o_ref[...] = y + b2_ref[...]                   # lane-dense (B, Op) store


def _pad_axis(a, axis, multiple):
    pad = (-a.shape[axis]) % multiple
    if pad == 0:
        return a
    widths = [(0, 0)] * a.ndim
    widths[axis] = (0, pad)
    return jnp.pad(a, widths)


def perception_forward(x, w1, b1, w2, b2, *, batch_tile=512):
    B, In = x.shape
    H = w1.shape[1]
    O = w2.shape[1]

    # One-time lane-dense padding of the feature dims (zero pad).  Padded
    # hidden columns pass through sigmoid but multiply zero rows of W2, so
    # they contribute exactly 0; padded output columns are sliced off below.
    w1p = _pad_axis(w1, 1, LANE)                       # (In, Hp)
    b1p = _pad_axis(b1, 1, LANE)                       # (1,  Hp)
    w2p = _pad_axis(_pad_axis(w2, 0, LANE), 1, LANE)   # (Hp, Op)
    b2p = _pad_axis(b2, 1, LANE)                       # (1,  Op)
    Hp = w1p.shape[1]
    Op = w2p.shape[1]

    if B <= batch_tile:
        # Single-tile path: no grid -> no software-pipeline bookkeeping.
        xb = _pad_axis(x, 0, SUBLANE)
        Bp = xb.shape[0]
        out = pl.pallas_call(
            perception_kernel,
            out_shape=jax.ShapeDtypeStruct((Bp, Op), jnp.float32),
            in_specs=[pl.BlockSpec(memory_space=pltpu.MemorySpace.VMEM)] * 5,
            out_specs=pl.BlockSpec(memory_space=pltpu.MemorySpace.VMEM),
        )(xb, w1p, b1p, w2p, b2p)
        return out[:B, :O]

    # Batched path: tile over B only; weights/biases stay resident in VMEM
    # across grid steps (constant index_map), batch axis is "parallel" so the
    # two v7x TensorCores split the batch (harmless on v5e/v6e).
    xb = _pad_axis(x, 0, batch_tile)
    Bp = xb.shape[0]
    out = pl.pallas_call(
        perception_kernel,
        out_shape=jax.ShapeDtypeStruct((Bp, Op), jnp.float32),
        grid_spec=pltpu.PrefetchScalarGridSpec(
            num_scalar_prefetch=0,
            grid=(Bp // batch_tile,),
            in_specs=[
                pl.BlockSpec((batch_tile, In), lambda i: (i, 0)),
                pl.BlockSpec((In, Hp), lambda i: (0, 0)),
                pl.BlockSpec((1, Hp), lambda i: (0, 0)),
                pl.BlockSpec((Hp, Op), lambda i: (0, 0)),
                pl.BlockSpec((1, Op), lambda i: (0, 0)),
            ],
            out_specs=pl.BlockSpec((batch_tile, Op), lambda i: (i, 0)),
        ),
        compiler_params=pltpu.CompilerParams(
            dimension_semantics=("parallel",)),
    )(xb, w1p, b1p, w2p, b2p)
    return out[:B, :O]


def perception_reference(x, w1, b1, w2, b2):
    h = jax.nn.sigmoid(x @ w1 + b1[0])
    return h @ w2 + b2[0]


if __name__ == "__main__":
    # Shapes implied by the module: in_feature=32, hidden_feature=64, out_feature=16
    B, IN, HID, OUT = 8, 32, 64, 16

    key = jax.random.PRNGKey(0)
    kx, kw1, kb1, kw2, kb2, kx2 = jax.random.split(key, 6)

    x = jax.random.normal(kx, (B, IN), dtype=jnp.float32)
    # torch.randn-style init (standard normal), shapes per Linear.__init__
    w1 = jax.random.normal(kw1, (IN, HID), dtype=jnp.float32)
    b1 = jax.random.normal(kb1, (1, HID), dtype=jnp.float32)
    w2 = jax.random.normal(kw2, (HID, OUT), dtype=jnp.float32)
    b2 = jax.random.normal(kb2, (1, OUT), dtype=jnp.float32)

    # Small-batch (no-grid) path.
    out = jax.block_until_ready(perception_forward(x, w1, b1, w2, b2))
    ref = perception_reference(x, w1, b1, w2, b2)
    assert out.shape == (B, OUT)
    assert jnp.allclose(out, ref, atol=1e-4, rtol=1e-4), "small-batch mismatch"

    # Batch-tiled (grid over B, resident weights) path, with ragged batch.
    BIG = 1300
    xb = jax.random.normal(kx2, (BIG, IN), dtype=jnp.float32)
    outb = jax.block_until_ready(
        perception_forward(xb, w1, b1, w2, b2, batch_tile=512))
    refb = perception_reference(xb, w1, b1, w2, b2)
    assert outb.shape == (BIG, OUT)
    assert jnp.allclose(outb, refb, atol=1e-4, rtol=1e-4), "tiled mismatch"

    print("KERNEL_OK")
</pallas_src>

<mosaic_0001>
module attributes {stable_mosaic.version = 11 : i64} {
  func.func @perception_kernel(%arg0: memref<8x32xf32, #tpu.memory_space<vmem>>, %arg1: memref<32x128xf32, #tpu.memory_space<vmem>>, %arg2: memref<1x128xf32, #tpu.memory_space<vmem>>, %arg3: memref<128x128xf32, #tpu.memory_space<vmem>>, %arg4: memref<1x128xf32, #tpu.memory_space<vmem>>, %arg5: memref<8x128xf32, #tpu.memory_space<vmem>>) attributes {dimension_semantics = [], scalar_prefetch = 0 : i64, scratch_operands = 0 : i64, tpu.core_type = #tpu.core_type<tc>} {
    %c0 = arith.constant 0 : index
    %c0_0 = arith.constant 0 : index
    %0 = vector.load %arg0[%c0, %c0_0] : memref<8x32xf32, #tpu.memory_space<vmem>>, vector<8x32xf32>
    %c0_1 = arith.constant 0 : index
    %c0_2 = arith.constant 0 : index
    %1 = vector.load %arg1[%c0_1, %c0_2] : memref<32x128xf32, #tpu.memory_space<vmem>>, vector<32x128xf32>
    %cst = arith.constant dense<0.000000e+00> : vector<8x128xf32>
    %2 = tpu.matmul %0, %1, %cst {dimension_numbers = #tpu.dot_dimension_numbers<[1], [0], [0], [1], [0, 0, 1, 1], [], []>} : vector<8x32xf32>, vector<32x128xf32>, vector<8x128xf32> -> vector<8x128xf32>
    %c0_3 = arith.constant 0 : index
    %c0_4 = arith.constant 0 : index
    %3 = vector.load %arg2[%c0_3, %c0_4] : memref<1x128xf32, #tpu.memory_space<vmem>>, vector<1x128xf32>
    %4 = vector.broadcast %3 : vector<1x128xf32> to vector<8x128xf32>
    %5 = arith.addf %2, %4 : vector<8x128xf32>
    %6 = arith.negf %5 : vector<8x128xf32>
    %7 = math.exp %6 : vector<8x128xf32>
    %cst_5 = arith.constant 1.000000e+00 : f32
    %8 = vector.broadcast %cst_5 : f32 to vector<8x128xf32>
    %9 = arith.addf %8, %7 : vector<8x128xf32>
    %10 = arith.divf %8, %9 : vector<8x128xf32>
    %c0_6 = arith.constant 0 : index
    %c0_7 = arith.constant 0 : index
    %11 = vector.load %arg3[%c0_6, %c0_7] : memref<128x128xf32, #tpu.memory_space<vmem>>, vector<128x128xf32>
    %cst_8 = arith.constant dense<0.000000e+00> : vector<8x128xf32>
    %12 = tpu.matmul %10, %11, %cst_8 {dimension_numbers = #tpu.dot_dimension_numbers<[1], [0], [0], [1], [0, 0, 1, 1], [], []>} : vector<8x128xf32>, vector<128x128xf32>, vector<8x128xf32> -> vector<8x128xf32>
    %c0_9 = arith.constant 0 : index
    %c0_10 = arith.constant 0 : index
    %13 = vector.load %arg4[%c0_9, %c0_10] : memref<1x128xf32, #tpu.memory_space<vmem>>, vector<1x128xf32>
    %14 = vector.broadcast %13 : vector<1x128xf32> to vector<8x128xf32>
    %15 = arith.addf %12, %14 : vector<8x128xf32>
    %c0_11 = arith.constant 0 : index
    %c0_12 = arith.constant 0 : index
    %16 = vector.load %arg5[%c0_11, %c0_12] : memref<8x128xf32, #tpu.memory_space<vmem>>, vector<8x128xf32>
    tpu.vector_store %arg5[%c0_11, %c0_12], %15 {strides = array<i32>} : memref<8x128xf32, #tpu.memory_space<vmem>>, vector<8x128xf32>,
    return
  }
}

</mosaic_0001>

<llo_original>
// kernel: tpu_custom_call.1
$region0: #{tpu_custom_call.1}
  #allocation0 [shape = 'u32[]', space=smem, size = 0x4, offset = 0x4, fixed_abs, tag = 'smem constant byte address 0x4 - core index']
  #allocation1 [shape = 'u32[72,128]{1,0:T(1,128)}', space=vmem, size = 0x9000, scoped, tag = 'internal scratch']
  %s0 = inlined_call_operand.hbm [shape: f32[8,32], index: 0, kind: input, shape index: {}]
  %s1 = inlined_call_operand.hbm [shape: f32[32,128], index: 1, kind: input, shape index: {}]
  %s2 = inlined_call_operand.vmem [shape: f32[1,128], index: 2, kind: input, shape index: {}]
  %s3 = inlined_call_operand.hbm [shape: f32[128,128], index: 3, kind: input, shape index: {}]
  %s4 = inlined_call_operand.vmem [shape: f32[1,128], index: 4, kind: input, shape index: {}]
  %s5 = inlined_call_operand.hbm [shape: f32[8,128], index: 5, kind: output, shape index: {}]
  %s6 = sld [smem:[#allocation0]]
  $region42: #{tpu_custom_call.1} parent=0
    _
  %s8 = ssub.s32 1, %s6
  %s9 = scalar_select 0, %s8, %s6
  $region1: #{tpu_custom_call.1} parent=0
    #allocation2 [shape = 'u8[4096]{0}', space=vmem, size = 0x1000, scoped, tag = 'input window, operand 0, single buffered']
    #allocation3 [shape = 's32[1]{0}', space=sflag, size = 0x4, scoped, tag = 'scoped memory for tpu_custom_call.1']
    #allocation4 [shape = 's32[1]{0}', space=sflag, size = 0x4, scoped, tag = 'scoped memory for tpu_custom_call.1']
    #allocation5 [shape = 'u8[16384]{0}', space=vmem, size = 0x4000, scoped, tag = 'input window, operand 1, single buffered']
    #allocation6 [shape = 's32[1]{0}', space=sflag, size = 0x4, scoped, tag = 'scoped memory for tpu_custom_call.1']
    #allocation7 [shape = 'u8[65536]{0}', space=vmem, size = 0x10000, scoped, tag = 'input window, operand 3, single buffered']
    #allocation8 [shape = 'u8[4096]{0}', space=vmem, size = 0x1000, scoped, tag = 'output window, operand 0, single buffered']
    %10 = vsyncpa [#allocation3], 0
    %11 = vsyncpa [#allocation6], 0
    %12 = vsyncpa [#allocation4], 0
    // Predicated region
    $region2: #{tpu_custom_call.1} parent=1 // pred_check
      _
    $region3: #{tpu_custom_call.1} parent=1 // pred_check_branch
      %14 = sbr.rel (0) target = $region5
    $region4: #{tpu_custom_call.1} parent=1 // pred_region
      %16 = vsyncadd [#allocation3], 0
      %s18 = sshll.u32 %s0, 4
      %s19 = int_to_ptr.hbm [resolvable:$true] %s18
      %s20 = sshll.u32 [#allocation2], 4
      %s21 = int_to_ptr.vmem [resolvable:$true] %s20
      %23 = dma.hbm_to_vmem [thread:$0]  %s19, 128, %s21, [#allocation3]
    $region5: #{tpu_custom_call.1} parent=1 // pred_fallthru
      _
    // Predicated region
    $region6: #{tpu_custom_call.1} parent=1 // pred_check
      _
    $region7: #{tpu_custom_call.1} parent=1 // pred_check_branch
      %25 = sbr.rel (0) target = $region9
    $region8: #{tpu_custom_call.1} parent=1 // pred_region
      %27 = vsyncadd [#allocation6], 0
      %s28 = sshll.u32 %s1, 4
      %s29 = int_to_ptr.hbm [resolvable:$true] %s28
      %s30 = sshll.u32 [#allocation5], 4
      %s31 = int_to_ptr.vmem [resolvable:$true] %s30
      %36 = dma.hbm_to_vmem [thread:$0]  %s29, 512, %s31, [#allocation6], 128, 128, 8
    $region9: #{tpu_custom_call.1} parent=1 // pred_fallthru
      _
    // Predicated region
    $region10: #{tpu_custom_call.1} parent=1 // pred_check
      _
    $region11: #{tpu_custom_call.1} parent=1 // pred_check_branch
      %38 = sbr.rel (0) target = $region13
    $region12: #{tpu_custom_call.1} parent=1 // pred_region
      _
    $region13: #{tpu_custom_call.1} parent=1 // pred_fallthru
      _
    // Predicated region
    $region14: #{tpu_custom_call.1} parent=1 // pred_check
      _
    $region15: #{tpu_custom_call.1} parent=1 // pred_check_branch
      %40 = sbr.rel (0) target = $region17
    $region16: #{tpu_custom_call.1} parent=1 // pred_region
      %42 = vsyncadd [#allocation6], 0
      %s43 = sshll.u32 %s3, 4
      %s44 = int_to_ptr.hbm [resolvable:$true] %s43
      %s45 = sshll.u32 [#allocation7], 4
      %s46 = int_to_ptr.vmem [resolvable:$true] %s45
      %51 = dma.hbm_to_vmem [thread:$0]  %s44, 2048, %s46, [#allocation6], 128, 128, 8
    $region17: #{tpu_custom_call.1} parent=1 // pred_fallthru
      _
    // Predicated region
    $region18: #{tpu_custom_call.1} parent=1 // pred_check
      _
    $region19: #{tpu_custom_call.1} parent=1 // pred_check_branch
      %53 = sbr.rel (0) target = $region21
    $region20: #{tpu_custom_call.1} parent=1 // pred_region
      _
    $region21: #{tpu_custom_call.1} parent=1 // pred_fallthru
      _
    // Predicated region
    $region22: #{tpu_custom_call.1} parent=1 // pred_check
      _
    $region23: #{tpu_custom_call.1} parent=1 // pred_check_branch
      %55 = sbr.rel (0) target = $region25
    $region24: #{tpu_custom_call.1} parent=1 // pred_region
      %57 = dma.done [#allocation3], 128
    $region25: #{tpu_custom_call.1} parent=1 // pred_fallthru
      _
    // Predicated region
    $region26: #{tpu_custom_call.1} parent=1 // pred_check
      _
    $region27: #{tpu_custom_call.1} parent=1 // pred_check_branch
      %59 = sbr.rel (0) target = $region29
    $region28: #{tpu_custom_call.1} parent=1 // pred_region
      %61 = dma.done [#allocation6], 512
    $region29: #{tpu_custom_call.1} parent=1 // pred_fallthru
      _
    // Predicated region
    $region30: #{tpu_custom_call.1} parent=1 // pred_check
      _
    $region31: #{tpu_custom_call.1} parent=1 // pred_check_branch
      %63 = sbr.rel (0) target = $region33
    $region32: #{tpu_custom_call.1} parent=1 // pred_region
      %65 = dma.done [#allocation6], 2048
    $region33: #{tpu_custom_call.1} parent=1 // pred_fallthru
      _
    %v66 = vld [vmem:[#allocation2] sm:$0xff]
    %v67 = vld [vmem:[#allocation5] sm:$0xff]
    %v68 = vld [vmem:[#allocation5 + $0x8] sm:$0xff]
    %v69 = vld [vmem:[#allocation5 + $0x10] sm:$0xff]
    %v70 = vld [vmem:[#allocation5 + $0x18] sm:$0xff]
    %v71 = vld [vmem:[%s2] sm:$0x1]
    %v73 = vperm.slane %v71, 0
    %vm75 = vcmask 261120
    %v77 = vsel %vm75, %v66, 0
    %79 = vmatpush.msra.mxu0 0.0
    %80 = vmatpush.msra.mxu0 0.0
    %81 = vmatpush.msra.mxu0 0.0
    %82 = vmatpush.msra.mxu0 0.0
    %83 = vmatpush.msra.mxu0 0.0
    %84 = vmatpush.msra.mxu0 0.0
    %85 = vmatpush.msra.mxu0 0.0
    %86 = vmatpush.msra.mxu0 0.0
    %87 = vmatpush.msra.mxu0 0.0
    %88 = vmatpush.msra.mxu0 0.0
    %89 = vmatpush.msra.mxu0 0.0
    %90 = vmatpush.msra.mxu0 0.0
    %91 = vmatpush.msra.mxu0 %v70
    %92 = vmatpush.msra.mxu0 %v69
    %93 = vmatpush.msra.mxu0 %v68
    %94 = vmatpush.msra.mxu0 %v67
    %95 = vmatmul.f32.gmra.mxu0 %v77
    %v96 = vpop.f32.mrf.mxu0
    %v97 = vadd.f32 %v73, %v96
    %98 = vdwg.mxu0
    %v99 = vxor.u32 %v97, 2147483648
    %v100 = vmul.f32 %v99, 1.442695
    %v101 = vpow.pop %v100
    %v102 = vadd.f32 %v101, 1.0
    %v103 = vrcp.pop %v102
    %v104 = vmul.f32 %v102, %v103
    %v105 = vsub.f32 1.0, %v104
    %v106 = vmul.f32 %v103, %v105
    %v107 = vadd.f32 %v103, %v106
    %vm108 = vweird.f32 %v102
    %vm109 = vweird.f32 %v103
    %vm110 = vmor %vm108, %vm109
    %v111 = vsel %vm110, %v103, %v107
    %v112 = vand.u32 2147483647, %v102
    %vm113 = vcmp.eq.f32.partialorder %v112, 8.507059e+37
    %v114 = vand.u32 %v102, 2147483648
    %v115 = vor.u32 1.1754944e-38, %v114
    %v116 = vsel %vm113, %v115, %v111
    %v117 = vmul.f32 1.0, %v116
    %v118 = vld [vmem:[#allocation7] sm:$0xff]
    %v119 = vld [vmem:[#allocation7 + $0x8] sm:$0xff]
    %v120 = vld [vmem:[#allocation7 + $0x10] sm:$0xff]
    %v121 = vld [vmem:[#allocation7 + $0x18] sm:$0xff]
    %v122 = vld [vmem:[#allocation7 + $0x20] sm:$0xff]
    %v123 = vld [vmem:[#allocation7 + $0x28] sm:$0xff]
    %v124 = vld [vmem:[#allocation7 + $0x30] sm:$0xff]
    %v125 = vld [vmem:[#allocation7 + $0x38] sm:$0xff]
    %v126 = vld [vmem:[#allocation7 + $0x40] sm:$0xff]
    %v127 = vld [vmem:[#allocation7 + $0x48] sm:$0xff]
    %v128 = vld [vmem:[#allocation7 + $0x50] sm:$0xff]
    %v129 = vld [vmem:[#allocation7 + $0x58] sm:$0xff]
    %v130 = vld [vmem:[#allocation7 + $0x60] sm:$0xff]
    %v131 = vld [vmem:[#allocation7 + $0x68] sm:$0xff]
    %v132 = vld [vmem:[#allocation7 + $0x70] sm:$0xff]
    %v133 = vld [vmem:[#allocation7 + $0x78] sm:$0xff]
    %v134 = vld [vmem:[%s4] sm:$0x1]
    %v136 = vperm.slane %v134, 0
    %138 = vmatpush.msra.mxu0 %v133
    %139 = vmatpush.msra.mxu0 %v132
    %140 = vmatpush.msra.mxu0 %v131
    %141 = vmatpush.msra.mxu0 %v130
    %142 = vmatpush.msra.mxu0 %v129
    %143 = vmatpush.msra.mxu0 %v128
    %144 = vmatpush.msra.mxu0 %v127
    %145 = vmatpush.msra.mxu0 %v126
    %146 = vmatpush.msra.mxu0 %v125
    %147 = vmatpush.msra.mxu0 %v124
    %148 = vmatpush.msra.mxu0 %v123
    %149 = vmatpush.msra.mxu0 %v122
    %150 = vmatpush.msra.mxu0 %v121
    %151 = vmatpush.msra.mxu0 %v120
    %152 = vmatpush.msra.mxu0 %v119
    %153 = vmatpush.msra.mxu0 %v118
    %154 = vmatmul.f32.gmra.mxu0 %v117
    %v155 = vpop.f32.mrf.mxu0
    %v156 = vadd.f32 %v136, %v155
    %157 = vdwg.mxu0
    %158 = vst [vmem:[#allocation8] sm:$0xff] %v156
    // Predicated region
    $region34: #{tpu_custom_call.1} parent=1 // pred_check
      _
    $region35: #{tpu_custom_call.1} parent=1 // pred_check_branch
      %160 = sbr.rel (0) target = $region37
    $region36: #{tpu_custom_call.1} parent=1 // pred_region
      %162 = vsyncadd [#allocation4], 0
      %s164 = sshll.u32 [#allocation8], 4
      %s165 = int_to_ptr.vmem [resolvable:$true] %s164
      %s166 = sshll.u32 %s5, 4
      %s167 = int_to_ptr.hbm [resolvable:$true] %s166
      %169 = dma.vmem_to_hbm [thread:$0]  %s165, 128, %s167, [#allocation4]
    $region37: #{tpu_custom_call.1} parent=1 // pred_fallthru
      _
    // Predicated region
    $region38: #{tpu_custom_call.1} parent=1 // pred_check
      _
    $region39: #{tpu_custom_call.1} parent=1 // pred_check_branch
      %171 = sbr.rel (0) target = $region41
    $region40: #{tpu_custom_call.1} parent=1 // pred_region
      %173 = dma.done [#allocation4], 128
    $region41: #{tpu_custom_call.1} parent=1 // pred_fallthru
      _
    %174 = vsyncpa [#allocation3], 1
    %175 = vsyncpa [#allocation6], 1
    %176 = vsyncpa [#allocation4], 1

</llo_original>
